<compile_context>
chip_gen: v6e
topology: v6e:2x2x1
jax: 0.10.0
libtpu: 0.0.40
codegen_flags: <defaults>
</compile_context>

<pallas_src>
import math

import jax
import jax.numpy as jnp
from jax import lax
from jax.experimental import pallas as pl
from jax.experimental.pallas import tpu as pltpu

# ---- small synthetic config -------------------------------------------------
LN_DIM = 1        # leading "layer" dim of features
BS = 2            # batch
NOBJ = 8          # num objects / sequence
HIDDEN = 32       # hidden_size
VOCAB = 32        # vocab_size -> pos_decoder output = 4*VOCAB = 128 (lane-dense)
LN_EPS = 1e-12    # BertLayerNorm epsilon


# ---- in-kernel helpers ------------------------------------------------------
def _erf(x):
    # Abramowitz & Stegun 7.1.26 (single-precision-safe, |abs err| < 1.5e-7).
    p = 0.3275911
    a1, a2, a3, a4, a5 = (0.254829592, -0.284496736, 1.421413741,
                          -1.453152027, 1.061405429)
    sign = jnp.where(x >= 0.0, 1.0, -1.0)
    ax = jnp.abs(x)
    t = 1.0 / (1.0 + p * ax)
    poly = ((((a5 * t + a4) * t + a3) * t + a2) * t + a1) * t
    return sign * (1.0 - poly * jnp.exp(-ax * ax))


def _gelu_exact(x):
    return 0.5 * x * (1.0 + _erf(x * 0.7071067811865476))


# ---- fused kernel: dense -> GELU -> BertLayerNorm -> pos_decoder ------------
def bbox_mlm_head_kernel(x_ref, wd_ref, bd_ref, g_ref, beta_ref,
                         wp_ref, bp_ref, out_ref):
    x = x_ref[...]                                                   # (N, H)

    # dense + exact GELU
    h = jnp.dot(x, wd_ref[...], preferred_element_type=jnp.float32) + bd_ref[...]
    h = _gelu_exact(h)

    # BertLayerNorm (TF style: eps inside the sqrt)
    mu = jnp.mean(h, axis=-1, keepdims=True)
    hc = h - mu
    var = jnp.mean(hc * hc, axis=-1, keepdims=True)
    h = hc * lax.rsqrt(var + LN_EPS) * g_ref[...] + beta_ref[...]

    # pos_decoder -> lane-dense (N, 4*vocab) slab
    out_ref[...] = (jnp.dot(h, wp_ref[...], preferred_element_type=jnp.float32)
                    + bp_ref[...])


# ---- wrapper ----------------------------------------------------------------
def bbox_mlm_head(features, params, vocab_size):
    ln, bs, nobj, hidden = features.shape
    n_rows = ln * bs * nobj
    out_dim = 4 * vocab_size

    x2d = features.reshape(n_rows, hidden)                           # fold batch

    vmem = pl.BlockSpec(memory_space=pltpu.MemorySpace.VMEM)
    y2d = pl.pallas_call(
        bbox_mlm_head_kernel,
        out_shape=jax.ShapeDtypeStruct((n_rows, out_dim), jnp.float32),
        in_specs=[vmem] * 7,
        out_specs=vmem,
    )(x2d,
      params["w_dense"], params["b_dense"],
      params["ln_gamma"], params["ln_beta"],
      params["w_dec"], params["b_dec"])

    # layout plumbing == torch reshape(ln, bs, n, vocab, 4).permute(4,0,1,2,3)
    y = y2d.reshape(ln, bs, nobj, vocab_size, 4)
    return jnp.transpose(y, (4, 0, 1, 2, 3))


# ---- pure-JAX reference (for a sanity check) --------------------------------
def bbox_mlm_head_ref(features, params, vocab_size):
    x = features @ params["w_dense"] + params["b_dense"][0]
    x = jax.nn.gelu(x, approximate=False)
    u = x.mean(-1, keepdims=True)
    s = ((x - u) ** 2).mean(-1, keepdims=True)
    x = (x - u) / jnp.sqrt(s + LN_EPS)
    x = params["ln_gamma"][0] * x + params["ln_beta"][0]
    x = x @ params["w_dec"] + params["b_dec"][0]
    ln, bs, nobj, _ = x.shape
    x = x.reshape(ln, bs, nobj, vocab_size, 4)
    return jnp.transpose(x, (4, 0, 1, 2, 3))


# ---- deterministic parameter init (nn.Linear-style uniform) -----------------
def init_params(key, hidden, vocab):
    k1, k2, k3, k4 = jax.random.split(key, 4)
    lim = 1.0 / math.sqrt(hidden)
    return {
        # weights stored pre-transposed to (in, out) so the kernel does x @ W + b
        "w_dense": jax.random.uniform(k1, (hidden, hidden), jnp.float32, -lim, lim),
        "b_dense": jax.random.uniform(k2, (1, hidden), jnp.float32, -lim, lim),
        "ln_gamma": jnp.ones((1, hidden), jnp.float32),
        "ln_beta": jnp.zeros((1, hidden), jnp.float32),
        "w_dec": jax.random.uniform(k3, (hidden, 4 * vocab), jnp.float32, -lim, lim),
        "b_dec": jax.random.uniform(k4, (1, 4 * vocab), jnp.float32, -lim, lim),
    }


if __name__ == "__main__":
    root = jax.random.PRNGKey(0)
    k_feat, k_par = jax.random.split(root)

    features = jax.random.normal(k_feat, (LN_DIM, BS, NOBJ, HIDDEN), jnp.float32)
    params = init_params(k_par, HIDDEN, VOCAB)

    out = bbox_mlm_head(features, params, VOCAB)
    out = jax.block_until_ready(out)

    assert out.shape == (4, LN_DIM, BS, NOBJ, VOCAB), out.shape
    assert bool(jnp.all(jnp.isfinite(out)))

    ref = bbox_mlm_head_ref(features, params, VOCAB)
    assert bool(jnp.allclose(out, ref, atol=1e-3, rtol=1e-3)), \
        float(jnp.max(jnp.abs(out - ref)))

    print("KERNEL_OK")
</pallas_src>

<mosaic_0001>
module attributes {stable_mosaic.version = 11 : i64} {
  func.func @bbox_mlm_head_kernel(%arg0: memref<16x32xf32, #tpu.memory_space<vmem>>, %arg1: memref<32x32xf32, #tpu.memory_space<vmem>>, %arg2: memref<1x32xf32, #tpu.memory_space<vmem>>, %arg3: memref<1x32xf32, #tpu.memory_space<vmem>>, %arg4: memref<1x32xf32, #tpu.memory_space<vmem>>, %arg5: memref<32x128xf32, #tpu.memory_space<vmem>>, %arg6: memref<1x128xf32, #tpu.memory_space<vmem>>, %arg7: memref<16x128xf32, #tpu.memory_space<vmem>>) attributes {dimension_semantics = [], scalar_prefetch = 0 : i64, scratch_operands = 0 : i64, tpu.core_type = #tpu.core_type<tc>} {
    %c0 = arith.constant 0 : index
    %c0_0 = arith.constant 0 : index
    %0 = vector.load %arg0[%c0, %c0_0] : memref<16x32xf32, #tpu.memory_space<vmem>>, vector<16x32xf32>
    %c0_1 = arith.constant 0 : index
    %c0_2 = arith.constant 0 : index
    %1 = vector.load %arg1[%c0_1, %c0_2] : memref<32x32xf32, #tpu.memory_space<vmem>>, vector<32x32xf32>
    %cst = arith.constant dense<0.000000e+00> : vector<16x32xf32>
    %2 = tpu.matmul %0, %1, %cst {dimension_numbers = #tpu.dot_dimension_numbers<[1], [0], [0], [1], [0, 0, 1, 1], [], []>} : vector<16x32xf32>, vector<32x32xf32>, vector<16x32xf32> -> vector<16x32xf32>
    %c0_3 = arith.constant 0 : index
    %c0_4 = arith.constant 0 : index
    %3 = vector.load %arg2[%c0_3, %c0_4] : memref<1x32xf32, #tpu.memory_space<vmem>>, vector<1x32xf32>
    %4 = vector.broadcast %3 : vector<1x32xf32> to vector<16x32xf32>
    %5 = arith.addf %2, %4 : vector<16x32xf32>
    %cst_5 = arith.constant 5.000000e-01 : f32
    %6 = vector.broadcast %cst_5 : f32 to vector<16x32xf32>
    %7 = arith.mulf %6, %5 : vector<16x32xf32>
    %cst_6 = arith.constant 0.707106769 : f32
    %8 = vector.broadcast %cst_6 : f32 to vector<16x32xf32>
    %9 = arith.mulf %5, %8 : vector<16x32xf32>
    %cst_7 = arith.constant 0.000000e+00 : f32
    %10 = vector.broadcast %cst_7 : f32 to vector<16x32xf32>
    %11 = arith.cmpf oge, %9, %10 : vector<16x32xf32>
    %cst_8 = arith.constant 1.000000e+00 : f32
    %cst_9 = arith.constant -1.000000e+00 : f32
    %12 = vector.broadcast %cst_8 : f32 to vector<16x32xf32>
    %13 = vector.broadcast %cst_9 : f32 to vector<16x32xf32>
    %14 = arith.select %11, %12, %13 : vector<16x32xi1>, vector<16x32xf32>
    %15 = math.absf %9 : vector<16x32xf32>
    %cst_10 = arith.constant 0.327591091 : f32
    %16 = vector.broadcast %cst_10 : f32 to vector<16x32xf32>
    %17 = arith.mulf %16, %15 : vector<16x32xf32>
    %cst_11 = arith.constant 1.000000e+00 : f32
    %18 = vector.broadcast %cst_11 : f32 to vector<16x32xf32>
    %19 = arith.addf %18, %17 : vector<16x32xf32>
    %cst_12 = arith.constant 1.000000e+00 : f32
    %20 = vector.broadcast %cst_12 : f32 to vector<16x32xf32>
    %21 = arith.divf %20, %19 : vector<16x32xf32>
    %cst_13 = arith.constant 1.06140542 : f32
    %22 = vector.broadcast %cst_13 : f32 to vector<16x32xf32>
    %23 = arith.mulf %22, %21 : vector<16x32xf32>
    %cst_14 = arith.constant -1.45315206 : f32
    %24 = vector.broadcast %cst_14 : f32 to vector<16x32xf32>
    %25 = arith.addf %23, %24 : vector<16x32xf32>
    %26 = arith.mulf %25, %21 : vector<16x32xf32>
    %cst_15 = arith.constant 1.42141378 : f32
    %27 = vector.broadcast %cst_15 : f32 to vector<16x32xf32>
    %28 = arith.addf %26, %27 : vector<16x32xf32>
    %29 = arith.mulf %28, %21 : vector<16x32xf32>
    %cst_16 = arith.constant -0.284496725 : f32
    %30 = vector.broadcast %cst_16 : f32 to vector<16x32xf32>
    %31 = arith.addf %29, %30 : vector<16x32xf32>
    %32 = arith.mulf %31, %21 : vector<16x32xf32>
    %cst_17 = arith.constant 0.254829586 : f32
    %33 = vector.broadcast %cst_17 : f32 to vector<16x32xf32>
    %34 = arith.addf %32, %33 : vector<16x32xf32>
    %35 = arith.mulf %34, %21 : vector<16x32xf32>
    %cst_18 = arith.constant 0.000000e+00 : f32
    %36 = vector.broadcast %cst_18 : f32 to vector<16x32xf32>
    %37 = arith.subf %36, %15 : vector<16x32xf32>
    %38 = arith.mulf %37, %15 : vector<16x32xf32>
    %39 = math.exp %38 : vector<16x32xf32>
    %40 = arith.mulf %35, %39 : vector<16x32xf32>
    %cst_19 = arith.constant 1.000000e+00 : f32
    %41 = vector.broadcast %cst_19 : f32 to vector<16x32xf32>
    %42 = arith.subf %41, %40 : vector<16x32xf32>
    %43 = arith.mulf %14, %42 : vector<16x32xf32>
    %cst_20 = arith.constant 1.000000e+00 : f32
    %44 = vector.broadcast %cst_20 : f32 to vector<16x32xf32>
    %45 = arith.addf %44, %43 : vector<16x32xf32>
    %46 = arith.mulf %7, %45 : vector<16x32xf32>
    %cst_21 = arith.constant dense<0.000000e+00> : vector<16xf32>
    %47 = vector.multi_reduction <add>, %46, %cst_21 [1] : vector<16x32xf32> to vector<16xf32>
    %48 = vector.shape_cast %47 : vector<16xf32> to vector<16x1xf32>
    %cst_22 = arith.constant 3.200000e+01 : f32
    %49 = vector.broadcast %cst_22 : f32 to vector<16x1xf32>
    %50 = arith.divf %48, %49 : vector<16x1xf32>
    %51 = vector.broadcast %50 : vector<16x1xf32> to vector<16x32xf32>
    %52 = arith.subf %46, %51 : vector<16x32xf32>
    %53 = arith.mulf %52, %52 : vector<16x32xf32>
    %cst_23 = arith.constant dense<0.000000e+00> : vector<16xf32>
    %54 = vector.multi_reduction <add>, %53, %cst_23 [1] : vector<16x32xf32> to vector<16xf32>
    %55 = vector.shape_cast %54 : vector<16xf32> to vector<16x1xf32>
    %cst_24 = arith.constant 3.200000e+01 : f32
    %56 = vector.broadcast %cst_24 : f32 to vector<16x1xf32>
    %57 = arith.divf %55, %56 : vector<16x1xf32>
    %cst_25 = arith.constant 9.99999996E-13 : f32
    %58 = vector.broadcast %cst_25 : f32 to vector<16x1xf32>
    %59 = arith.addf %57, %58 : vector<16x1xf32>
    %60 = math.rsqrt %59 : vector<16x1xf32>
    %61 = vector.broadcast %60 : vector<16x1xf32> to vector<16x32xf32>
    %62 = arith.mulf %52, %61 : vector<16x32xf32>
    %c0_26 = arith.constant 0 : index
    %c0_27 = arith.constant 0 : index
    %63 = vector.load %arg3[%c0_26, %c0_27] : memref<1x32xf32, #tpu.memory_space<vmem>>, vector<1x32xf32>
    %64 = vector.broadcast %63 : vector<1x32xf32> to vector<16x32xf32>
    %65 = arith.mulf %62, %64 : vector<16x32xf32>
    %c0_28 = arith.constant 0 : index
    %c0_29 = arith.constant 0 : index
    %66 = vector.load %arg4[%c0_28, %c0_29] : memref<1x32xf32, #tpu.memory_space<vmem>>, vector<1x32xf32>
    %67 = vector.broadcast %66 : vector<1x32xf32> to vector<16x32xf32>
    %68 = arith.addf %65, %67 : vector<16x32xf32>
    %c0_30 = arith.constant 0 : index
    %c0_31 = arith.constant 0 : index
    %69 = vector.load %arg5[%c0_30, %c0_31] : memref<32x128xf32, #tpu.memory_space<vmem>>, vector<32x128xf32>
    %cst_32 = arith.constant dense<0.000000e+00> : vector<16x128xf32>
    %70 = tpu.matmul %68, %69, %cst_32 {dimension_numbers = #tpu.dot_dimension_numbers<[1], [0], [0], [1], [0, 0, 1, 1], [], []>} : vector<16x32xf32>, vector<32x128xf32>, vector<16x128xf32> -> vector<16x128xf32>
    %c0_33 = arith.constant 0 : index
    %c0_34 = arith.constant 0 : index
    %71 = vector.load %arg6[%c0_33, %c0_34] : memref<1x128xf32, #tpu.memory_space<vmem>>, vector<1x128xf32>
    %72 = vector.broadcast %71 : vector<1x128xf32> to vector<16x128xf32>
    %73 = arith.addf %70, %72 : vector<16x128xf32>
    %c0_35 = arith.constant 0 : index
    %c0_36 = arith.constant 0 : index
    %74 = vector.load %arg7[%c0_35, %c0_36] : memref<16x128xf32, #tpu.memory_space<vmem>>, vector<16x128xf32>
    tpu.vector_store %arg7[%c0_35, %c0_36], %73 {strides = array<i32>} : memref<16x128xf32, #tpu.memory_space<vmem>>, vector<16x128xf32>,
    return
  }
}

</mosaic_0001>

<llo_original>
// kernel: tpu_custom_call.1
$region0: #{tpu_custom_call.1}
  #allocation0 [shape = 'u32[]', space=smem, size = 0x4, offset = 0x4, fixed_abs, tag = 'smem constant byte address 0x4 - core index']
  #allocation1 [shape = 'u32[144,128]{1,0:T(1,128)}', space=vmem, size = 0x12000, scoped, tag = 'internal scratch']
  %s0 = inlined_call_operand.hbm [shape: f32[16,32], index: 0, kind: input, shape index: {}]
  %s1 = inlined_call_operand.hbm [shape: f32[32,32], index: 1, kind: input, shape index: {}]
  %s2 = inlined_call_operand.vmem [shape: f32[1,32], index: 2, kind: input, shape index: {}]
  %s3 = inlined_call_operand.vmem [shape: f32[1,32], index: 3, kind: input, shape index: {}]
  %s4 = inlined_call_operand.vmem [shape: f32[1,32], index: 4, kind: input, shape index: {}]
  %s5 = inlined_call_operand.hbm [shape: f32[32,128], index: 5, kind: input, shape index: {}]
  %s6 = inlined_call_operand.vmem [shape: f32[1,128], index: 6, kind: input, shape index: {}]
  %s7 = inlined_call_operand.hbm [shape: f32[16,128], index: 7, kind: output, shape index: {}]
  %s8 = sld [smem:[#allocation0]]
  $region50: #{tpu_custom_call.1} parent=0
    _
  %s10 = ssub.s32 1, %s8
  %s11 = scalar_select 0, %s10, %s8
  $region1: #{tpu_custom_call.1} parent=0
    #allocation2 [shape = 'u8[8192]{0}', space=vmem, size = 0x2000, scoped, tag = 'input window, operand 0, single buffered']
    #allocation3 [shape = 's32[1]{0}', space=sflag, size = 0x4, scoped, tag = 'scoped memory for tpu_custom_call.1']
    #allocation4 [shape = 's32[1]{0}', space=sflag, size = 0x4, scoped, tag = 'scoped memory for tpu_custom_call.1']
    #allocation5 [shape = 'u8[16384]{0}', space=vmem, size = 0x4000, scoped, tag = 'input window, operand 1, single buffered']
    #allocation6 [shape = 's32[1]{0}', space=sflag, size = 0x4, scoped, tag = 'scoped memory for tpu_custom_call.1']
    #allocation7 [shape = 'u8[16384]{0}', space=vmem, size = 0x4000, scoped, tag = 'input window, operand 5, single buffered']
    #allocation8 [shape = 'u8[8192]{0}', space=vmem, size = 0x2000, scoped, tag = 'output window, operand 0, single buffered']
    %12 = vsyncpa [#allocation3], 0
    %13 = vsyncpa [#allocation6], 0
    %14 = vsyncpa [#allocation4], 0
    // Predicated region
    $region2: #{tpu_custom_call.1} parent=1 // pred_check
      _
    $region3: #{tpu_custom_call.1} parent=1 // pred_check_branch
      %16 = sbr.rel (0) target = $region5
    $region4: #{tpu_custom_call.1} parent=1 // pred_region
      %s18 = ssub.s32 256, 256
      %19 = vsyncadd [#allocation3], %s18
      %s20 = sshll.u32 [#allocation2], 4
      %s21 = int_to_ptr.vmem [resolvable:$true] %s20
      %26 = dma.hbm_to_vmem [thread:$0]  %s0, 256, %s21, [#allocation3], 128, 128, 8
    $region5: #{tpu_custom_call.1} parent=1 // pred_fallthru
      _
    // Predicated region
    $region6: #{tpu_custom_call.1} parent=1 // pred_check
      _
    $region7: #{tpu_custom_call.1} parent=1 // pred_check_branch
      %28 = sbr.rel (0) target = $region9
    $region8: #{tpu_custom_call.1} parent=1 // pred_region
      %s30 = ssub.s32 512, 512
      %31 = vsyncadd [#allocation6], %s30
      %s32 = sshll.u32 [#allocation5], 4
      %s33 = int_to_ptr.vmem [resolvable:$true] %s32
      %38 = dma.hbm_to_vmem [thread:$0]  %s1, 512, %s33, [#allocation6], 128, 128, 8
    $region9: #{tpu_custom_call.1} parent=1 // pred_fallthru
      _
    // Predicated region
    $region10: #{tpu_custom_call.1} parent=1 // pred_check
      _
    $region11: #{tpu_custom_call.1} parent=1 // pred_check_branch
      %40 = sbr.rel (0) target = $region13
    $region12: #{tpu_custom_call.1} parent=1 // pred_region
      _
    $region13: #{tpu_custom_call.1} parent=1 // pred_fallthru
      _
    // Predicated region
    $region14: #{tpu_custom_call.1} parent=1 // pred_check
      _
    $region15: #{tpu_custom_call.1} parent=1 // pred_check_branch
      %42 = sbr.rel (0) target = $region17
    $region16: #{tpu_custom_call.1} parent=1 // pred_region
      _
    $region17: #{tpu_custom_call.1} parent=1 // pred_fallthru
      _
    // Predicated region
    $region18: #{tpu_custom_call.1} parent=1 // pred_check
      _
    $region19: #{tpu_custom_call.1} parent=1 // pred_check_branch
      %44 = sbr.rel (0) target = $region21
    $region20: #{tpu_custom_call.1} parent=1 // pred_region
      _
    $region21: #{tpu_custom_call.1} parent=1 // pred_fallthru
      _
    // Predicated region
    $region22: #{tpu_custom_call.1} parent=1 // pred_check
      _
    $region23: #{tpu_custom_call.1} parent=1 // pred_check_branch
      %46 = sbr.rel (0) target = $region25
    $region24: #{tpu_custom_call.1} parent=1 // pred_region
      %s48 = ssub.s32 512, 512
      %49 = vsyncadd [#allocation6], %s48
      %s50 = sshll.u32 [#allocation7], 4
      %s51 = int_to_ptr.vmem [resolvable:$true] %s50
      %56 = dma.hbm_to_vmem [thread:$0]  %s5, 512, %s51, [#allocation6], 128, 128, 8
    $region25: #{tpu_custom_call.1} parent=1 // pred_fallthru
      _
    // Predicated region
    $region26: #{tpu_custom_call.1} parent=1 // pred_check
      _
    $region27: #{tpu_custom_call.1} parent=1 // pred_check_branch
      %58 = sbr.rel (0) target = $region29
    $region28: #{tpu_custom_call.1} parent=1 // pred_region
      _
    $region29: #{tpu_custom_call.1} parent=1 // pred_fallthru
      _
    // Predicated region
    $region30: #{tpu_custom_call.1} parent=1 // pred_check
      _
    $region31: #{tpu_custom_call.1} parent=1 // pred_check_branch
      %60 = sbr.rel (0) target = $region33
    $region32: #{tpu_custom_call.1} parent=1 // pred_region
      %61 = dma.done [#allocation3], 256
    $region33: #{tpu_custom_call.1} parent=1 // pred_fallthru
      _
    // Predicated region
    $region34: #{tpu_custom_call.1} parent=1 // pred_check
      _
    $region35: #{tpu_custom_call.1} parent=1 // pred_check_branch
      %63 = sbr.rel (0) target = $region37
    $region36: #{tpu_custom_call.1} parent=1 // pred_region
      %64 = dma.done [#allocation6], 512
    $region37: #{tpu_custom_call.1} parent=1 // pred_fallthru
      _
    // Predicated region
    $region38: #{tpu_custom_call.1} parent=1 // pred_check
      _
    $region39: #{tpu_custom_call.1} parent=1 // pred_check_branch
      %66 = sbr.rel (0) target = $region41
    $region40: #{tpu_custom_call.1} parent=1 // pred_region
      %67 = dma.done [#allocation6], 512
    $region41: #{tpu_custom_call.1} parent=1 // pred_fallthru
      _
    %v68 = vld [vmem:[#allocation2] sm:$0xff]
    %v69 = vld [vmem:[#allocation2 + $0x8] sm:$0xff]
    %v70 = vld [vmem:[#allocation5] sm:$0xff]
    %v71 = vld [vmem:[#allocation5 + $0x8] sm:$0xff]
    %v72 = vld [vmem:[#allocation5 + $0x10] sm:$0xff]
    %v73 = vld [vmem:[#allocation5 + $0x18] sm:$0xff]
    %v74 = vld [vmem:[%s2] sm:$0x1]
    %v76 = vlaneseq
    %v77 = vshrl.u32 %v76, 7
    %v78 = vsub.s32 0, %v77
    %v79 = vrot.slane %v74, %v78
    %vm81 = vcmask 261120
    %v83 = vsel %vm81, %v68, 0
    %v86 = vsel %vm81, %v69, 0
    %88 = vmatprep.subr.mxu0 0.0
    %89 = vmatpush1.msra.mxu0 0.0
    %90 = vmatprep.subr.mxu0 0.0
    %91 = vmatpush1.msra.mxu0 0.0
    %92 = vmatprep.subr.mxu0 0.0
    %93 = vmatpush1.msra.mxu0 0.0
    %94 = vmatprep.subr.mxu0 0.0
    %95 = vmatpush1.msra.mxu0 0.0
    %96 = vmatprep.subr.mxu0 0.0
    %97 = vmatpush1.msra.mxu0 0.0
    %98 = vmatprep.subr.mxu0 0.0
    %99 = vmatpush1.msra.mxu0 0.0
    %100 = vmatprep.subr.mxu0 0.0
    %101 = vmatpush1.msra.mxu0 0.0
    %102 = vmatprep.subr.mxu0 0.0
    %103 = vmatpush1.msra.mxu0 0.0
    %104 = vmatprep.subr.mxu0 0.0
    %105 = vmatpush1.msra.mxu0 0.0
    %106 = vmatprep.subr.mxu0 0.0
    %107 = vmatpush1.msra.mxu0 0.0
    %108 = vmatprep.subr.mxu0 0.0
    %109 = vmatpush1.msra.mxu0 0.0
    %110 = vmatprep.subr.mxu0 0.0
    %111 = vmatpush1.msra.mxu0 0.0
    %112 = vmatprep.subr.mxu0 0.0
    %113 = vmatpush1.msra.mxu0 %v73
    %114 = vmatprep.subr.mxu0 0.0
    %115 = vmatpush1.msra.mxu0 %v72
    %116 = vmatprep.subr.mxu0 0.0
    %117 = vmatpush1.msra.mxu0 %v71
    %118 = vmatprep.subr.mxu0 0.0
    %119 = vmatpush1.msra.mxu0 %v70
    %120 = vmatprep.subr.mxu0 0.0
    %121 = vmatpush2.msra.mxu0 0.0
    %122 = vmatprep.subr.mxu0 0.0
    %123 = vmatpush2.msra.mxu0 0.0
    %124 = vmatprep.subr.mxu0 0.0
    %125 = vmatpush2.msra.mxu0 0.0
    %126 = vmatprep.subr.mxu0 0.0
    %127 = vmatpush2.msra.mxu0 0.0
    %128 = vmatprep.subr.mxu0 0.0
    %129 = vmatpush2.msra.mxu0 0.0
    %130 = vmatprep.subr.mxu0 0.0
    %131 = vmatpush2.msra.mxu0 0.0
    %132 = vmatprep.subr.mxu0 0.0
    %133 = vmatpush2.msra.mxu0 0.0
    %134 = vmatprep.subr.mxu0 0.0
    %135 = vmatpush2.msra.mxu0 0.0
    %136 = vmatprep.subr.mxu0 0.0
    %137 = vmatpush2.msra.mxu0 0.0
    %138 = vmatprep.subr.mxu0 0.0
    %139 = vmatpush2.msra.mxu0 0.0
    %140 = vmatprep.subr.mxu0 0.0
    %141 = vmatpush2.msra.mxu0 0.0
    %142 = vmatprep.subr.mxu0 0.0
    %143 = vmatpush2.msra.mxu0 0.0
    %144 = vmatprep.subr.mxu0 0.0
    %145 = vmatpush2.msra.mxu0 0.0
    %146 = vmatprep.subr.mxu0 0.0
    %147 = vmatpush2.msra.mxu0 0.0
    %148 = vmatprep.subr.mxu0 0.0
    %149 = vmatpush2.msra.mxu0 0.0
    %150 = vmatprep.subr.mxu0 0.0
    %151 = vmatpush2.msra.mxu0 0.0
    %152 = vmatprep.mubr.f32.mxu0 0.0
    %153 = vmatmul.mubr.f32.gmra.mxu0 %v83
    %v154 = vpop.f32.mrf.mxu0
    %v155 = vadd.f32 %v79, %v154
    %v156 = vpop.f32.mrf.mxu0
    %157 = vmatprep.mubr.f32.mxu0 0.0
    %158 = vmatmul.mubr.f32.gmra.mxu0 %v86
    %v159 = vpop.f32.mrf.mxu0
    %v160 = vadd.f32 %v79, %v159
    %v161 = vpop.f32.mrf.mxu0
    %162 = vdwg.mxu0
    %v163 = vmul.f32 %v155, 0.5
    %v164 = vmul.f32 %v160, 0.5
    %v165 = vmul.f32 %v155, 0.70710677
    %v166 = vmul.f32 %v160, 0.70710677
    %vm167 = vcmp.ge.f32.partialorder %v165, 0.0
    %vm168 = vcmp.ge.f32.partialorder %v166, 0.0
    %v169 = vsel %vm167, 1.0, -1.0
    %v170 = vsel %vm168, 1.0, -1.0
    %v171 = vand.u32 2147483647, %v165
    %v172 = vand.u32 2147483647, %v166
    %v173 = vmul.f32 %v171, 0.3275911
    %v174 = vmul.f32 %v172, 0.3275911
    %v175 = vadd.f32 %v173, 1.0
    %v176 = vadd.f32 %v174, 1.0
    %v177 = vrcp.pop %v175
    %v178 = vmul.f32 1.0, %v177
    %v179 = vrcp.pop %v176
    %v180 = vmul.f32 1.0, %v179
    %v181 = vmul.f32 %v178, 1.0614054
    %v182 = vmul.f32 %v180, 1.0614054
    %v183 = vadd.f32 %v181, -1.4531521
    %v184 = vadd.f32 %v182, -1.4531521
    %v185 = vmul.f32 %v183, %v178
    %v186 = vmul.f32 %v184, %v180
    %v187 = vadd.f32 %v185, 1.4214138
    %v188 = vadd.f32 %v186, 1.4214138
    %v189 = vmul.f32 %v187, %v178
    %v190 = vmul.f32 %v188, %v180
    %v191 = vadd.f32 %v189, -0.28449672
    %v192 = vadd.f32 %v190, -0.28449672
    %v193 = vmul.f32 %v191, %v178
    %v194 = vmul.f32 %v192, %v180
    %v195 = vadd.f32 %v193, 0.2548296
    %v196 = vadd.f32 %v194, 0.2548296
    %v197 = vmul.f32 %v195, %v178
    %v198 = vmul.f32 %v196, %v180
    %v199 = vsub.f32 0.0, %v171
    %v200 = vsub.f32 0.0, %v172
    %v201 = vmul.f32 %v199, %v171
    %v202 = vmul.f32 %v200, %v172
    %v203 = vmul.f32 %v201, 1.442695
    %v204 = vpow.pop %v203
    %v205 = vmul.f32 %v202, 1.442695
    %v206 = vpow.pop %v205
    %v207 = vmul.f32 %v197, %v204
    %v208 = vmul.f32 %v198, %v206
    %v209 = vsub.f32 1.0, %v207
    %v210 = vsub.f32 1.0, %v208
    %v211 = vmul.f32 %v169, %v209
    %v212 = vmul.f32 %v170, %v210
    %v213 = vadd.f32 %v211, 1.0
    %v214 = vadd.f32 %v212, 1.0
    %v215 = vmul.f32 %v163, %v213
    %v216 = vmul.f32 %v164, %v214
    %v217 = vsel %vm81, %v215, 0.0
    %218 = vadd.xlane.f32.xlu0 %v217
    %v219 = vpop.xlane.xlu0 %218
    %v220 = vsel %vm81, %v216, 0.0
    %221 = vadd.xlane.f32.xlu0 %v220
    %v222 = vpop.xlane.xlu0 %221
    %v223 = vrcp.pop 32.0
    %v224 = vmul.f32 %v219, %v223
    %v225 = vmul.f32 %v222, %v223
    %v226 = vsub.f32 %v215, %v224
    %v227 = vsub.f32 %v216, %v225
    %v228 = vmul.f32 %v226, %v226
    %v229 = vmul.f32 %v227, %v227
    %v230 = vsel %vm81, %v228, 0.0
    %231 = vadd.xlane.f32.xlu0 %v230
    %v232 = vpop.xlane.xlu0 %231
    %v233 = vsel %vm81, %v229, 0.0
    %234 = vadd.xlane.f32.xlu0 %v233
    %v235 = vpop.xlane.xlu0 %234
    %v236 = vmul.f32 %v232, %v223
    %v237 = vmul.f32 %v235, %v223
    %v238 = vadd.f32 %v236, 1e-12
    %v239 = vadd.f32 %v237, 1e-12
    %v240 = vrsqrt.pop %v238
    %v241 = vrsqrt.pop %v239
    %v242 = vmul.f32 %v226, %v240
    %v243 = vmul.f32 %v227, %v241
    %v244 = vld [vmem:[%s3] sm:$0x1]
    %v246 = vlaneseq
    %v247 = vshrl.u32 %v246, 7
    %v248 = vsub.s32 0, %v247
    %v249 = vrot.slane %v244, %v248
    %v251 = vmul.f32 %v242, %v249
    %v252 = vmul.f32 %v243, %v249
    %v253 = vld [vmem:[%s4] sm:$0x1]
    %v255 = vlaneseq
    %v256 = vshrl.u32 %v255, 7
    %v257 = vsub.s32 0, %v256
    %v258 = vrot.slane %v253, %v257
    %v260 = vadd.f32 %v251, %v258
    %v261 = vadd.f32 %v252, %v258
    %v262 = vld [vmem:[#allocation7] sm:$0xff]
    %v263 = vld [vmem:[#allocation7 + $0x8] sm:$0xff]
    %v264 = vld [vmem:[#allocation7 + $0x10] sm:$0xff]
    %v265 = vld [vmem:[#allocation7 + $0x18] sm:$0xff]
    %v266 = vld [vmem:[%s6] sm:$0x1]
    %v268 = vlaneseq
    %v269 = vshrl.u32 %v268, 7
    %v270 = vsub.s32 0, %v269
    %v271 = vrot.slane %v266, %v270
    %v274 = vsel %vm81, %v260, 0
    %v277 = vsel %vm81, %v261, 0
    %279 = vmatprep.subr.mxu0 0.0
    %280 = vmatpush1.msra.mxu0 0.0
    %281 = vmatprep.subr.mxu0 0.0
    %282 = vmatpush1.msra.mxu0 0.0
    %283 = vmatprep.subr.mxu0 0.0
    %284 = vmatpush1.msra.mxu0 0.0
    %285 = vmatprep.subr.mxu0 0.0
    %286 = vmatpush1.msra.mxu0 0.0
    %287 = vmatprep.subr.mxu0 0.0
    %288 = vmatpush1.msra.mxu0 0.0
    %289 = vmatprep.subr.mxu0 0.0
    %290 = vmatpush1.msra.mxu0 0.0
    %291 = vmatprep.subr.mxu0 0.0
    %292 = vmatpush1.msra.mxu0 0.0
    %293 = vmatprep.subr.mxu0 0.0
    %294 = vmatpush1.msra.mxu0 0.0
    %295 = vmatprep.subr.mxu0 0.0
    %296 = vmatpush1.msra.mxu0 0.0
    %297 = vmatprep.subr.mxu0 0.0
    %298 = vmatpush1.msra.mxu0 0.0
    %299 = vmatprep.subr.mxu0 0.0
    %300 = vmatpush1.msra.mxu0 0.0
    %301 = vmatprep.subr.mxu0 0.0
    %302 = vmatpush1.msra.mxu0 0.0
    %303 = vmatprep.subr.mxu0 0.0
    %304 = vmatpush1.msra.mxu0 %v265
    %305 = vmatprep.subr.mxu0 0.0
    %306 = vmatpush1.msra.mxu0 %v264
    %307 = vmatprep.subr.mxu0 0.0
    %308 = vmatpush1.msra.mxu0 %v263
    %309 = vmatprep.subr.mxu0 0.0
    %310 = vmatpush1.msra.mxu0 %v262
    %311 = vmatprep.subr.mxu0 0.0
    %312 = vmatpush2.msra.mxu0 0.0
    %313 = vmatprep.subr.mxu0 0.0
    %314 = vmatpush2.msra.mxu0 0.0
    %315 = vmatprep.subr.mxu0 0.0
    %316 = vmatpush2.msra.mxu0 0.0
    %317 = vmatprep.subr.mxu0 0.0
    %318 = vmatpush2.msra.mxu0 0.0
    %319 = vmatprep.subr.mxu0 0.0
    %320 = vmatpush2.msra.mxu0 0.0
    %321 = vmatprep.subr.mxu0 0.0
    %322 = vmatpush2.msra.mxu0 0.0
    %323 = vmatprep.subr.mxu0 0.0
    %324 = vmatpush2.msra.mxu0 0.0
    %325 = vmatprep.subr.mxu0 0.0
    %326 = vmatpush2.msra.mxu0 0.0
    %327 = vmatprep.subr.mxu0 0.0
    %328 = vmatpush2.msra.mxu0 0.0
    %329 = vmatprep.subr.mxu0 0.0
    %330 = vmatpush2.msra.mxu0 0.0
    %331 = vmatprep.subr.mxu0 0.0
    %332 = vmatpush2.msra.mxu0 0.0
    %333 = vmatprep.subr.mxu0 0.0
    %334 = vmatpush2.msra.mxu0 0.0
    %335 = vmatprep.subr.mxu0 0.0
    %336 = vmatpush2.msra.mxu0 0.0
    %337 = vmatprep.subr.mxu0 0.0
    %338 = vmatpush2.msra.mxu0 0.0
    %339 = vmatprep.subr.mxu0 0.0
    %340 = vmatpush2.msra.mxu0 0.0
    %341 = vmatprep.subr.mxu0 0.0
    %342 = vmatpush2.msra.mxu0 0.0
    %343 = vmatprep.mubr.f32.mxu0 0.0
    %344 = vmatmul.mubr.f32.gmra.mxu0 %v274
    %v345 = vpop.f32.mrf.mxu0
    %v346 = vadd.f32 %v271, %v345
    %v347 = vpop.f32.mrf.mxu0
    %348 = vmatprep.mubr.f32.mxu0 0.0
    %349 = vmatmul.mubr.f32.gmra.mxu0 %v277
    %v350 = vpop.f32.mrf.mxu0
    %v351 = vadd.f32 %v271, %v350
    %v352 = vpop.f32.mrf.mxu0
    %353 = vdwg.mxu0
    %354 = vst [vmem:[#allocation8] sm:$0xff] %v346
    %355 = vst [vmem:[#allocation8 + $0x8] sm:$0xff] %v351
    // Predicated region
    $region42: #{tpu_custom_call.1} parent=1 // pred_check
      _
    $region43: #{tpu_custom_call.1} parent=1 // pred_check_branch
      %357 = sbr.rel (0) target = $region45
    $region44: #{tpu_custom_call.1} parent=1 // pred_region
      %s359 = ssub.s32 256, 256
      %360 = vsyncadd [#allocation4], %s359
      %s361 = sshll.u32 [#allocation8], 4
      %s362 = int_to_ptr.vmem [resolvable:$true] %s361
      %367 = dma.vmem_to_hbm [thread:$0]  %s362, 256, %s7, [#allocation4], 128, 128, 8
    $region45: #{tpu_custom_call.1} parent=1 // pred_fallthru
      _
    // Predicated region
    $region46: #{tpu_custom_call.1} parent=1 // pred_check
      _
    $region47: #{tpu_custom_call.1} parent=1 // pred_check_branch
      %369 = sbr.rel (0) target = $region49
    $region48: #{tpu_custom_call.1} parent=1 // pred_region
      %370 = dma.done [#allocation4], 256
    $region49: #{tpu_custom_call.1} parent=1 // pred_fallthru
      _
    %371 = vsyncpa [#allocation3], 1
    %372 = vsyncpa [#allocation6], 1
    %373 = vsyncpa [#allocation4], 1

</llo_original>
